<compile_context>
chip_gen: v7x
topology: tpu7x:2x2x1
jax: 0.10.0
libtpu: 0.0.40
codegen_flags: <defaults>
</compile_context>

<pallas_src>
import functools

import jax
import jax.numpy as jnp
from jax.experimental import pallas as pl
from jax.experimental.pallas import tpu as pltpu

_SMALL_BATCH_MAX = 128  # grid-less path for B <= this


def _round_up(x, m):
    return ((x + m - 1) // m) * m


def _fused_mlp_kernel(num_layers, x_ref, *refs):
    """refs = (w_0, b_0, ..., w_{L-1}, b_{L-1}, o_ref).

    Computes o = relu(... relu(relu(x @ w0 + b0) @ w1 + b1) ...).
    Layer count is static, so the Python loop unrolls at trace time and all
    intermediate activations stay on-chip (vregs/VMEM), never touching HBM.
    """
    o_ref = refs[2 * num_layers]
    h = x_ref[...].astype(jnp.float32)
    for layer in range(num_layers):
        w = refs[2 * layer][...]          # bf16 (in, out) - MXU-native operand
        b = refs[2 * layer + 1][...]      # f32  (1, out)
        # bf16 x bf16 matmul with f32 accumulation on the MXU.
        y = jnp.dot(h.astype(jnp.bfloat16), w,
                    preferred_element_type=jnp.float32)
        # Epilogue (bias broadcast + ReLU) stays in f32 (v5e-safe).
        h = jnp.maximum(y + b, 0.0)
    o_ref[...] = h.astype(o_ref.dtype)


def _select_block_b(batch):
    """Pick the batch tile for the tiled path.

    Prefer 512 rows (fills the 256-wide v6e/v7x MXU M dim twice over and is
    ~85% of HBM roofline per measured tiled-copy data), but keep >= 4 grid
    steps when possible so v7x's two TensorCores each get >= 2 pipelined
    steps; never fewer than 2 steps.
    """
    for cand in (512, 256, 128):
        if pl.cdiv(batch, cand) >= 4:
            return cand
    for cand in (512, 256, 128):
        if pl.cdiv(batch, cand) >= 2:
            return cand
    return 128


def _vmem_budget_bytes(block_b, in_dim, flat, out_dim):
    """Explicit VMEM budget for the tiled path.

    x tile + output tile are double-buffered f32; weights/biases are
    grid-invariant single-buffered residents; the activation h and the matmul
    result live on-chip in f32.  2x headroom for compiler temporaries and
    (8,128) layout padding; clamp to [32 MiB default scoped, 64 MiB v7x
    physical].  (Also raises v5e's 16 MiB default scoped limit.)
    """
    xb = 2 * block_b * in_dim * 4
    ob = 2 * block_b * out_dim * 4
    params_b = sum(int(a.size) * a.dtype.itemsize for a in flat)
    max_width = max(int(a.shape[-1]) for a in flat[0::2])
    act = 2 * block_b * max(max_width, in_dim) * 4
    est = xb + ob + params_b + act
    return int(min(max(2 * est, 32 << 20), 64 << 20))


def fused_mlp_forward(x, params):
    """Whole BodyNetwork forward in one pallas_call."""
    num_layers = len(params)
    B, in_dim = x.shape
    orig_out_dim = params[-1][0].shape[1]

    # Lane-dense output store: pad the final layer's out dim to a multiple of
    # 128 (unmasked vst instead of vst.msk); slice outside the kernel.
    out_dim = _round_up(orig_out_dim, 128)
    if out_dim != orig_out_dim:
        w_last, b_last = params[-1]
        pad = out_dim - orig_out_dim
        w_last = jnp.pad(w_last, ((0, 0), (0, pad)))
        b_last = jnp.pad(b_last, ((0, 0), (0, pad)))
        params = list(params[:-1]) + [(w_last, b_last)]

    # MXU-native bf16 weights, f32 biases (no-op casts if already stored so).
    flat = []
    for w, b in params:
        flat.append(w.astype(jnp.bfloat16))
        flat.append(b.astype(jnp.float32))

    kernel = functools.partial(_fused_mlp_kernel, num_layers)

    if B <= _SMALL_BATCH_MAX:
        # Small batch: grid-less, everything resident in VMEM.  Pad rows to a
        # multiple of 16 (bf16 sublane packing of the matmul operand).
        # TODO(synk): this path is dispatch/DMA-latency bound; if it is hot,
        # batch multiple forward calls together instead of tuning the kernel.
        bp = max(_round_up(B, 16), 16)
        xp = jnp.pad(x, ((0, bp - B), (0, 0))) if bp != B else x
        vmem_spec = pl.BlockSpec(memory_space=pltpu.MemorySpace.VMEM)
        out = pl.pallas_call(
            kernel,
            out_shape=jax.ShapeDtypeStruct((bp, out_dim), x.dtype),
            in_specs=[vmem_spec] * (1 + 2 * num_layers),
            out_specs=vmem_spec,
        )(xp, *flat)
        return out[:B, :orig_out_dim]

    # Tiled path: grid over the (padded) batch, "parallel" so v7x's two
    # TensorCores split it.  Zero-pad the batch so no undefined rows exist.
    block_b = _select_block_b(B)
    bp = _round_up(B, block_b)
    xp = jnp.pad(x, ((0, bp - B), (0, 0))) if bp != B else x

    in_specs = [pl.BlockSpec((block_b, in_dim), lambda i: (i, 0))]
    for idx in range(num_layers):
        w = flat[2 * idx]
        b = flat[2 * idx + 1]
        # Grid-invariant operands: single-buffered (no pointless double
        # buffering of resident weights).
        in_specs.append(pl.BlockSpec(w.shape, lambda i: (0, 0),
                                     pipeline_mode=pl.Buffered(1)))
        in_specs.append(pl.BlockSpec(b.shape, lambda i: (0, 0),
                                     pipeline_mode=pl.Buffered(1)))

    out = pl.pallas_call(
        kernel,
        out_shape=jax.ShapeDtypeStruct((bp, out_dim), x.dtype),
        grid=(bp // block_b,),
        in_specs=in_specs,
        out_specs=pl.BlockSpec((block_b, out_dim), lambda i: (i, 0)),
        compiler_params=pltpu.CompilerParams(
            dimension_semantics=("parallel",),
            vmem_limit_bytes=_vmem_budget_bytes(block_b, in_dim, flat,
                                                out_dim)),
    )(xp, *flat)
    return out[:B, :orig_out_dim]


@jax.jit
def body_network_forward(x, params):
    """Forward pass of BodyNetwork (fused Linear+ReLU stack)."""
    return fused_mlp_forward(x, params)


def init_body_network_params(key, input_dim, hidden_layers=2, hidden_units=128):
    """Deterministic init mimicking nn.Linear default (uniform +-1/sqrt(fan_in)).

    Weights stored as (in_features, out_features) in bf16 (MXU-native);
    biases as (1, out_features) in f32 (epilogue stays f32).
    """
    params = []
    dims = [input_dim] + [hidden_units] * hidden_layers
    for i in range(hidden_layers):
        fan_in, fan_out = dims[i], dims[i + 1]
        key, kw, kb = jax.random.split(key, 3)
        bound = 1.0 / float(fan_in) ** 0.5
        w = jax.random.uniform(kw, (fan_in, fan_out), jnp.float32,
                               minval=-bound, maxval=bound)
        b = jax.random.uniform(kb, (1, fan_out), jnp.float32,
                               minval=-bound, maxval=bound)
        params.append((w.astype(jnp.bfloat16), b))
    return params


def _reference_forward(x, params):
    h = x.astype(jnp.float32)
    for w, b in params:
        h = jnp.maximum(h @ w.astype(jnp.float32) + b.astype(jnp.float32), 0.0)
    return h


if __name__ == "__main__":
    key = jax.random.PRNGKey(0)
    input_dim = 32
    hidden_layers = 2
    hidden_units = 128

    key, kp, k1, k2, k3 = jax.random.split(key, 5)
    params = init_body_network_params(kp, input_dim, hidden_layers,
                                      hidden_units)
    # bf16 operands + f32 accumulation => loosened tolerances vs f32 reference.
    tol = dict(atol=2e-2, rtol=2e-2)

    # 1) Small batch -> grid-less path, rows padded to 16, all VMEM-resident.
    x_small = jax.random.normal(k1, (5, input_dim), jnp.float32)
    out_small = jax.block_until_ready(body_network_forward(x_small, params))
    assert out_small.shape == (5, hidden_units)
    assert jnp.allclose(out_small, _reference_forward(x_small, params), **tol), \
        "small-batch mismatch vs reference"

    # 2) Medium, non-divisible batch -> tiled path, block_b=128, grid=2
    #    (one step per v7x TensorCore), zero-padded last tile.
    x_med = jax.random.normal(k2, (250, input_dim), jnp.float32)
    out_med = jax.block_until_ready(body_network_forward(x_med, params))
    assert out_med.shape == (250, hidden_units)
    assert jnp.allclose(out_med, _reference_forward(x_med, params), **tol), \
        "medium-batch mismatch vs reference"

    # 3) Large batch -> fat 512-row tiles (fills the 256-wide MXU M dim),
    #    grid=4 so both v7x TensorCores get 2 pipelined steps each.
    x_big = jax.random.normal(k3, (2048, input_dim), jnp.float32)
    out_big = jax.block_until_ready(body_network_forward(x_big, params))
    assert out_big.shape == (2048, hidden_units)
    assert jnp.allclose(out_big, _reference_forward(x_big, params), **tol), \
        "tiled-batch mismatch vs reference"

    print("KERNEL_OK")
</pallas_src>

<mosaic_0001>
module attributes {stable_mosaic.version = 11 : i64} {
  func.func @_fused_mlp_kernel(%arg0: memref<16x32xf32, #tpu.memory_space<vmem>>, %arg1: memref<32x128xbf16, #tpu.memory_space<vmem>>, %arg2: memref<1x128xf32, #tpu.memory_space<vmem>>, %arg3: memref<128x128xbf16, #tpu.memory_space<vmem>>, %arg4: memref<1x128xf32, #tpu.memory_space<vmem>>, %arg5: memref<16x128xf32, #tpu.memory_space<vmem>>) attributes {dimension_semantics = [], scalar_prefetch = 0 : i64, scratch_operands = 0 : i64, tpu.core_type = #tpu.core_type<tc>} {
    %c0 = arith.constant 0 : index
    %c0_0 = arith.constant 0 : index
    %0 = vector.load %arg0[%c0, %c0_0] : memref<16x32xf32, #tpu.memory_space<vmem>>, vector<16x32xf32>
    %c0_1 = arith.constant 0 : index
    %c0_2 = arith.constant 0 : index
    %1 = vector.load %arg1[%c0_1, %c0_2] : memref<32x128xbf16, #tpu.memory_space<vmem>>, vector<32x128xbf16>
    %c0_3 = arith.constant 0 : index
    %c0_4 = arith.constant 0 : index
    %2 = vector.load %arg2[%c0_3, %c0_4] : memref<1x128xf32, #tpu.memory_space<vmem>>, vector<1x128xf32>
    %3 = arith.truncf %0 : vector<16x32xf32> to vector<16x32xbf16>
    %cst = arith.constant dense<0.000000e+00> : vector<16x128xf32>
    %4 = tpu.matmul %3, %1, %cst {dimension_numbers = #tpu.dot_dimension_numbers<[1], [0], [0], [1], [0, 0, 1, 1], [], []>} : vector<16x32xbf16>, vector<32x128xbf16>, vector<16x128xf32> -> vector<16x128xf32>
    %5 = vector.broadcast %2 : vector<1x128xf32> to vector<16x128xf32>
    %6 = arith.addf %4, %5 : vector<16x128xf32>
    %cst_5 = arith.constant 0.000000e+00 : f32
    %7 = vector.broadcast %cst_5 : f32 to vector<16x128xf32>
    %8 = arith.maximumf %6, %7 : vector<16x128xf32>
    %c0_6 = arith.constant 0 : index
    %c0_7 = arith.constant 0 : index
    %9 = vector.load %arg3[%c0_6, %c0_7] : memref<128x128xbf16, #tpu.memory_space<vmem>>, vector<128x128xbf16>
    %c0_8 = arith.constant 0 : index
    %c0_9 = arith.constant 0 : index
    %10 = vector.load %arg4[%c0_8, %c0_9] : memref<1x128xf32, #tpu.memory_space<vmem>>, vector<1x128xf32>
    %11 = arith.truncf %8 : vector<16x128xf32> to vector<16x128xbf16>
    %cst_10 = arith.constant dense<0.000000e+00> : vector<16x128xf32>
    %12 = tpu.matmul %11, %9, %cst_10 {dimension_numbers = #tpu.dot_dimension_numbers<[1], [0], [0], [1], [0, 0, 1, 1], [], []>} : vector<16x128xbf16>, vector<128x128xbf16>, vector<16x128xf32> -> vector<16x128xf32>
    %13 = vector.broadcast %10 : vector<1x128xf32> to vector<16x128xf32>
    %14 = arith.addf %12, %13 : vector<16x128xf32>
    %cst_11 = arith.constant 0.000000e+00 : f32
    %15 = vector.broadcast %cst_11 : f32 to vector<16x128xf32>
    %16 = arith.maximumf %14, %15 : vector<16x128xf32>
    %c0_12 = arith.constant 0 : index
    %c0_13 = arith.constant 0 : index
    %17 = vector.load %arg5[%c0_12, %c0_13] : memref<16x128xf32, #tpu.memory_space<vmem>>, vector<16x128xf32>
    tpu.vector_store %arg5[%c0_12, %c0_13], %16 {strides = array<i32>} : memref<16x128xf32, #tpu.memory_space<vmem>>, vector<16x128xf32>,
    return
  }
}

</mosaic_0001>

<llo_original>
// kernel: body_network_forward.1
$region0: #{body_network_forward.1}
  #allocation0 [shape = 'u32[]', space=smem, size = 0x4, offset = 0x4, fixed_abs, tag = 'smem constant byte address 0x4 - core index']
  #allocation1 [shape = 'u32[144,128]{1,0:T(1,128)}', space=vmem, size = 0x12000, scoped, tag = 'internal scratch']
  %s0 = inlined_call_operand.vmem [shape: f32[16,32], index: 0, kind: input, shape index: {}]
  %s1 = inlined_call_operand.vmem [shape: bf16[32,128], index: 1, kind: input, shape index: {}]
  %s2 = inlined_call_operand.vmem [shape: f32[1,128], index: 2, kind: input, shape index: {}]
  %s3 = inlined_call_operand.hbm [shape: bf16[128,128], index: 3, kind: input, shape index: {}]
  %s4 = inlined_call_operand.vmem [shape: f32[1,128], index: 4, kind: input, shape index: {}]
  %s5 = inlined_call_operand.vmem [shape: f32[16,128], index: 5, kind: output, shape index: {}]
  %s6 = sld [smem:[#allocation0]]
  $region34: #{body_network_forward.1} parent=0
    _
  %s8 = ssub.s32 1, %s6
  %s9 = scalar_select 0, %s8, %s6
  $region1: #{body_network_forward.1} parent=0
    #allocation2 [shape = 'u8[32768]{0}', space=vmem, size = 0x8000, scoped, tag = 'input window, operand 3, single buffered']
    #allocation3 [shape = 's32[1]{0}', space=sflag, size = 0x4, scoped, tag = 'scoped memory for body_network_forward.1']
    %10 = vsyncpa [#allocation3], 0
    // Predicated region
    $region2: #{body_network_forward.1} parent=1 // pred_check
      _
    $region3: #{body_network_forward.1} parent=1 // pred_check_branch
      %12 = sbr.rel (0) target = $region5
    $region4: #{body_network_forward.1} parent=1 // pred_region
      _
    $region5: #{body_network_forward.1} parent=1 // pred_fallthru
      _
    // Predicated region
    $region6: #{body_network_forward.1} parent=1 // pred_check
      _
    $region7: #{body_network_forward.1} parent=1 // pred_check_branch
      %14 = sbr.rel (0) target = $region9
    $region8: #{body_network_forward.1} parent=1 // pred_region
      _
    $region9: #{body_network_forward.1} parent=1 // pred_fallthru
      _
    // Predicated region
    $region10: #{body_network_forward.1} parent=1 // pred_check
      _
    $region11: #{body_network_forward.1} parent=1 // pred_check_branch
      %16 = sbr.rel (0) target = $region13
    $region12: #{body_network_forward.1} parent=1 // pred_region
      _
    $region13: #{body_network_forward.1} parent=1 // pred_fallthru
      _
    // Predicated region
    $region14: #{body_network_forward.1} parent=1 // pred_check
      _
    $region15: #{body_network_forward.1} parent=1 // pred_check_branch
      %18 = sbr.rel (0) target = $region17
    $region16: #{body_network_forward.1} parent=1 // pred_region
      %s20 = ssub.s32 1024, 1024
      %21 = vsyncadd [#allocation3], %s20
      %s22 = sshll.u32 [#allocation2], 4
      %s23 = int_to_ptr.vmem [resolvable:$true] %s22
      %28 = dma.hbm_to_vmem [thread:$0]  %s3, 1024, %s23, [#allocation3], 64, 64, 4
    $region17: #{body_network_forward.1} parent=1 // pred_fallthru
      _
    // Predicated region
    $region18: #{body_network_forward.1} parent=1 // pred_check
      _
    $region19: #{body_network_forward.1} parent=1 // pred_check_branch
      %30 = sbr.rel (0) target = $region21
    $region20: #{body_network_forward.1} parent=1 // pred_region
      _
    $region21: #{body_network_forward.1} parent=1 // pred_fallthru
      _
    // Predicated region
    $region22: #{body_network_forward.1} parent=1 // pred_check
      _
    $region23: #{body_network_forward.1} parent=1 // pred_check_branch
      %32 = sbr.rel (0) target = $region25
    $region24: #{body_network_forward.1} parent=1 // pred_region
      %33 = dma.done [#allocation3], 1024
    $region25: #{body_network_forward.1} parent=1 // pred_fallthru
      _
    %v35 = vld [vmem:[%s0] sm:$0xff]
    %v36 = vld [vmem:[%s0 + $0x8] sm:$0xff]
    %v37 = vld [vmem:[%s1] sm:$0xf]
    %v38 = vld [vmem:[%s1 + $0x4] sm:$0xf]
    %v39 = vld [vmem:[%s1 + $0x8] sm:$0xf]
    %v40 = vld [vmem:[%s1 + $0xc] sm:$0xf]
    %v41 = vld [vmem:[%s2] sm:$0x1]
    %v42 = vpack.c.bf16 %v36, %v35
    %v44 = vlaneseq
    %v45 = vshrl.u32 %v44, 7
    %v46 = vsub.s32 0, %v45
    %v47 = vrot.slane %v41, %v46
    %v53 = vunpack.c.l.b16 %v37
    %v54 = vunpack.c.l.b16 %v38
    %v55 = vunpack.c.l.b16 %v39
    %v56 = vunpack.c.l.b16 %v40
    %v57 = vpack.c.b16 %v54, %v53
    %v58 = vpack.c.b16 %v56, %v55
    %vm61 = vcmask 261120
    %v63 = vsel %vm61, %v42, 0
    %65 = vmatprep.subr.bf16.mxu0 0
    %66 = vmatpush1.bf16.msra.mxu0 %v57
    %67 = vmatprep.subr.bf16.mxu0 0
    %68 = vmatpush1.bf16.msra.mxu0 %v58
    %69 = vmatprep.subr.bf16.mxu0 0
    %70 = vmatpush1.bf16.msra.mxu0 0
    %71 = vmatprep.subr.bf16.mxu0 0
    %72 = vmatpush1.bf16.msra.mxu0 0
    %73 = vmatprep.subr.bf16.mxu0 0
    %74 = vmatpush1.bf16.msra.mxu0 0
    %75 = vmatprep.subr.bf16.mxu0 0
    %76 = vmatpush1.bf16.msra.mxu0 0
    %77 = vmatprep.subr.bf16.mxu0 0
    %78 = vmatpush1.bf16.msra.mxu0 0
    %79 = vmatprep.subr.bf16.mxu0 0
    %80 = vmatpush1.bf16.msra.mxu0 0
    %81 = vmatprep.subr.bf16.mxu0 0
    %82 = vmatpush1.bf16.msra.mxu0 0
    %83 = vmatprep.subr.bf16.mxu0 0
    %84 = vmatpush1.bf16.msra.mxu0 0
    %85 = vmatprep.subr.bf16.mxu0 0
    %86 = vmatpush1.bf16.msra.mxu0 0
    %87 = vmatprep.subr.bf16.mxu0 0
    %88 = vmatpush1.bf16.msra.mxu0 0
    %89 = vmatprep.subr.bf16.mxu0 0
    %90 = vmatpush1.bf16.msra.mxu0 0
    %91 = vmatprep.subr.bf16.mxu0 0
    %92 = vmatpush1.bf16.msra.mxu0 0
    %93 = vmatprep.subr.bf16.mxu0 0
    %94 = vmatpush1.bf16.msra.mxu0 0
    %95 = vmatprep.subr.bf16.mxu0 0
    %96 = vmatpush1.bf16.msra.mxu0 0
    %97 = vmatprep.mubr.bf16.mxu0 0
    %98 = vmatmul.mubr.bf16.gmra.mrb[0].mxu0 %v63
    %v99 = vpop.f32.mrb[0].mxu0
    %v100 = vadd.f32 %v47, %v99
    %v101 = vpop.f32.mrb[0].mxu0
    %v102 = vpop.f32.mrb[0].mxu0
    %v103 = vadd.f32 %v47, %v102
    %v104 = vpop.f32.mrb[0].mxu0
    %105 = vdwg.mxu0
    %v106 = vmax.f32 %v100, 0.0
    %v107 = vmax.f32 %v103, 0.0
    %v108 = vld [vmem:[#allocation2] sm:$0xf]
    %v109 = vld [vmem:[#allocation2 + $0x4] sm:$0xf]
    %v110 = vld [vmem:[#allocation2 + $0x8] sm:$0xf]
    %v111 = vld [vmem:[#allocation2 + $0xc] sm:$0xf]
    %v112 = vld [vmem:[#allocation2 + $0x10] sm:$0xf]
    %v113 = vld [vmem:[#allocation2 + $0x14] sm:$0xf]
    %v114 = vld [vmem:[#allocation2 + $0x18] sm:$0xf]
    %v115 = vld [vmem:[#allocation2 + $0x1c] sm:$0xf]
    %v116 = vld [vmem:[#allocation2 + $0x20] sm:$0xf]
    %v117 = vld [vmem:[#allocation2 + $0x24] sm:$0xf]
    %v118 = vld [vmem:[#allocation2 + $0x28] sm:$0xf]
    %v119 = vld [vmem:[#allocation2 + $0x2c] sm:$0xf]
    %v120 = vld [vmem:[#allocation2 + $0x30] sm:$0xf]
    %v121 = vld [vmem:[#allocation2 + $0x34] sm:$0xf]
    %v122 = vld [vmem:[#allocation2 + $0x38] sm:$0xf]
    %v123 = vld [vmem:[#allocation2 + $0x3c] sm:$0xf]
    %v124 = vld [vmem:[%s4] sm:$0x1]
    %v125 = vpack.c.bf16 %v107, %v106
    %v127 = vlaneseq
    %v128 = vshrl.u32 %v127, 7
    %v129 = vsub.s32 0, %v128
    %v130 = vrot.slane %v124, %v129
    %v148 = vunpack.c.l.b16 %v108
    %v149 = vunpack.c.l.b16 %v109
    %v150 = vunpack.c.l.b16 %v110
    %v151 = vunpack.c.l.b16 %v111
    %v152 = vunpack.c.l.b16 %v112
    %v153 = vunpack.c.l.b16 %v113
    %v154 = vunpack.c.l.b16 %v114
    %v155 = vunpack.c.l.b16 %v115
    %v156 = vunpack.c.l.b16 %v116
    %v157 = vunpack.c.l.b16 %v117
    %v158 = vunpack.c.l.b16 %v118
    %v159 = vunpack.c.l.b16 %v119
    %v160 = vunpack.c.l.b16 %v120
    %v161 = vunpack.c.l.b16 %v121
    %v162 = vunpack.c.l.b16 %v122
    %v163 = vunpack.c.l.b16 %v123
    %v164 = vpack.c.b16 %v149, %v148
    %v165 = vpack.c.b16 %v151, %v150
    %v166 = vpack.c.b16 %v153, %v152
    %v167 = vpack.c.b16 %v155, %v154
    %v168 = vpack.c.b16 %v157, %v156
    %v169 = vpack.c.b16 %v159, %v158
    %v170 = vpack.c.b16 %v161, %v160
    %v171 = vpack.c.b16 %v163, %v162
    %180 = vmatprep.subr.bf16.mxu0 0
    %181 = vmatpush1.bf16.msra.mxu0 %v164
    %182 = vmatprep.subr.bf16.mxu0 0
    %183 = vmatpush1.bf16.msra.mxu0 %v165
    %184 = vmatprep.subr.bf16.mxu0 0
    %185 = vmatpush1.bf16.msra.mxu0 %v166
    %186 = vmatprep.subr.bf16.mxu0 0
    %187 = vmatpush1.bf16.msra.mxu0 %v167
    %188 = vmatprep.subr.bf16.mxu0 0
    %189 = vmatpush1.bf16.msra.mxu0 %v168
    %190 = vmatprep.subr.bf16.mxu0 0
    %191 = vmatpush1.bf16.msra.mxu0 %v169
    %192 = vmatprep.subr.bf16.mxu0 0
    %193 = vmatpush1.bf16.msra.mxu0 %v170
    %194 = vmatprep.subr.bf16.mxu0 0
    %195 = vmatpush1.bf16.msra.mxu0 %v171
    %196 = vmatprep.subr.bf16.mxu0 0
    %197 = vmatpush1.bf16.msra.mxu0 0
    %198 = vmatprep.subr.bf16.mxu0 0
    %199 = vmatpush1.bf16.msra.mxu0 0
    %200 = vmatprep.subr.bf16.mxu0 0
    %201 = vmatpush1.bf16.msra.mxu0 0
    %202 = vmatprep.subr.bf16.mxu0 0
    %203 = vmatpush1.bf16.msra.mxu0 0
    %204 = vmatprep.subr.bf16.mxu0 0
    %205 = vmatpush1.bf16.msra.mxu0 0
    %206 = vmatprep.subr.bf16.mxu0 0
    %207 = vmatpush1.bf16.msra.mxu0 0
    %208 = vmatprep.subr.bf16.mxu0 0
    %209 = vmatpush1.bf16.msra.mxu0 0
    %210 = vmatprep.subr.bf16.mxu0 0
    %211 = vmatpush1.bf16.msra.mxu0 0
    %212 = vmatprep.mubr.bf16.mxu0 0
    %213 = vmatmul.mubr.bf16.gmra.mrb[0].mxu0 %v125
    %v214 = vpop.f32.mrb[0].mxu0
    %v215 = vadd.f32 %v130, %v214
    %v216 = vpop.f32.mrb[0].mxu0
    %v217 = vpop.f32.mrb[0].mxu0
    %v218 = vadd.f32 %v130, %v217
    %v219 = vpop.f32.mrb[0].mxu0
    %220 = vdwg.mxu0
    %v221 = vmax.f32 %v215, 0.0
    %v222 = vmax.f32 %v218, 0.0
    %223 = vst [vmem:[%s5] sm:$0xff] %v221
    %224 = vst [vmem:[%s5 + $0x8] sm:$0xff] %v222
    // Predicated region
    $region26: #{body_network_forward.1} parent=1 // pred_check
      _
    $region27: #{body_network_forward.1} parent=1 // pred_check_branch
      %226 = sbr.rel (0) target = $region29
    $region28: #{body_network_forward.1} parent=1 // pred_region
      _
    $region29: #{body_network_forward.1} parent=1 // pred_fallthru
      _
    // Predicated region
    $region30: #{body_network_forward.1} parent=1 // pred_check
      _
    $region31: #{body_network_forward.1} parent=1 // pred_check_branch
      %228 = sbr.rel (0) target = $region33
    $region32: #{body_network_forward.1} parent=1 // pred_region
      _
    $region33: #{body_network_forward.1} parent=1 // pred_fallthru
      _
    %229 = vsyncpa [#allocation3], 1

</llo_original>
